<compile_context>
chip_gen: v6e
topology: v6e:2x2x1
jax: 0.10.0
libtpu: 0.0.40
codegen_flags: <defaults>
</compile_context>

<pallas_src>
import math

import jax
import jax.numpy as jnp
from jax.experimental import pallas as pl
from jax.experimental.pallas import tpu as pltpu


def _identity_kernel(x_ref, o_ref):
    # Pure VMEM load -> VMEM store; the kernel is entirely DMA / HBM-BW bound,
    # so no per-element work is added (v5e's single vector-store slot is moot).
    o_ref[...] = x_ref[...]


_TARGET_BLOCK_BYTES = 8 * 1024 * 1024   # ~8 MiB row-slab blocks (per review)
_VMEM_LIMIT_BYTES = 48 * 1024 * 1024    # 4x block (dbl-buffered in+out) = 32 MiB << 48 MiB
_SUBLANE_MIN = {4: 8, 2: 16, 1: 32}     # itemsize -> minimum sublane multiple


def _pallas_identity_copy(x: jnp.ndarray) -> jnp.ndarray:
    """Tiled, lane-dense HBM copy of x (only used when force_kernel=True)."""
    n = x.size
    itemsize = jnp.dtype(x.dtype).itemsize
    sub_min = _SUBLANE_MIN.get(itemsize, 8)

    # A pure-reshape 2-D view (rows, cols) with cols % 128 == 0 AND
    # rows % sub_min == 0 requires n % (128 * sub_min) == 0.  Ragged sizes
    # would need pad/slice copies that only add HBM traffic; identity is free.
    if n == 0 or n % (128 * sub_min) != 0:
        return x

    # Lane-dense cols: largest power-of-two multiple of 128 (capped at 8192)
    # such that rows = n // cols stays a multiple of sub_min (always true here
    # because cols divides n // sub_min).
    m = n // sub_min
    cols = 128 * math.gcd(m // 128, 64)
    rows = n // cols

    # Contiguous row-slab blocks only (block_cols == cols -> one linear DMA per
    # grid step); block_rows is a sublane-aligned divisor of rows.
    max_rows = max(
        sub_min,
        (_TARGET_BLOCK_BYTES // (cols * itemsize)) // sub_min * sub_min,
    )
    block_rows = min(rows, max_rows)
    while rows % block_rows:
        block_rows -= sub_min

    num_steps = rows // block_rows
    # Megacore split only pays off with enough row-blocks to amortize sync.
    dims = ("parallel",) if num_steps >= 4 else ("arbitrary",)

    x2d = x.reshape(rows, cols)
    out2d = pl.pallas_call(
        _identity_kernel,
        out_shape=jax.ShapeDtypeStruct((rows, cols), x.dtype),
        grid=(num_steps,),
        in_specs=[pl.BlockSpec((block_rows, cols), lambda i: (i, 0))],
        out_specs=pl.BlockSpec((block_rows, cols), lambda i: (i, 0)),
        input_output_aliases={0: 0},  # real only when the caller donates x
        compiler_params=pltpu.CompilerParams(
            dimension_semantics=dims,
            vmem_limit_bytes=_VMEM_LIMIT_BYTES,
        ),
        cost_estimate=pl.CostEstimate(
            flops=0, transcendentals=0, bytes_accessed=2 * n * itemsize),
    )(x2d)
    return out2d.reshape(x.shape)


def no_norm(x: jnp.ndarray, *, force_kernel: bool = False) -> jnp.ndarray:
    """NoNorm.forward(x) == x.

    Default: return x unchanged (zero HBM traffic — strictly optimal on every
    TPU generation, as recommended by the performance review).
    force_kernel=True: run the tuned Pallas copy kernel instead.
    """
    if not force_kernel:
        return x
    return _pallas_identity_copy(x)


if __name__ == "__main__":
    key = jax.random.PRNGKey(0)
    # Small NCHW-like input consistent with a "norm" layer fed conv features.
    x = jax.random.normal(key, (2, 4, 16, 16), dtype=jnp.float32)

    # 1) Default NoNorm forward: zero-cost identity (the optimal path).
    y = jax.block_until_ready(no_norm(x))
    assert y.shape == x.shape and y.dtype == x.dtype
    assert bool(jnp.all(y == x))

    # 2) Pallas kernel path, with the input donated so input_output_aliases
    #    {0: 0} is honored without a hidden defensive copy.
    run_kernel = jax.jit(lambda a: no_norm(a, force_kernel=True),
                         donate_argnums=(0,))
    x_donated = jnp.copy(x)
    y_k = jax.block_until_ready(run_kernel(x_donated))
    assert y_k.shape == x.shape and y_k.dtype == x.dtype
    assert bool(jnp.all(y_k == x))

    print("KERNEL_OK")
</pallas_src>

<mosaic_0001>
module attributes {stable_mosaic.version = 11 : i64} {
  func.func @_identity_kernel(%arg0: i32, %arg1: memref<8x256xf32, #tpu.memory_space<vmem>>, %arg2: memref<8x256xf32, #tpu.memory_space<vmem>>) attributes {dimension_semantics = [#tpu.dimension_semantics<arbitrary>], iteration_bounds = array<i64: 1>, scalar_prefetch = 0 : i64, scratch_operands = 0 : i64, tpu.core_type = #tpu.core_type<tc>, window_params = [{transform_indices = @transform_0, window_bounds = array<i64: 8, 256>}, {transform_indices = @transform_1, window_bounds = array<i64: 8, 256>}]} {
    %c0 = arith.constant 0 : index
    %c0_0 = arith.constant 0 : index
    %0 = vector.load %arg1[%c0, %c0_0] : memref<8x256xf32, #tpu.memory_space<vmem>>, vector<8x256xf32>
    %c0_1 = arith.constant 0 : index
    %c0_2 = arith.constant 0 : index
    %1 = vector.load %arg2[%c0_1, %c0_2] : memref<8x256xf32, #tpu.memory_space<vmem>>, vector<8x256xf32>
    tpu.vector_store %arg2[%c0_1, %c0_2], %0 {strides = array<i32>} : memref<8x256xf32, #tpu.memory_space<vmem>>, vector<8x256xf32>,
    return
  }
  func.func @transform_0(%arg0: i32) -> (i32, i32) {
    %c0_i32 = arith.constant 0 : i32
    %c0_i32_0 = arith.constant 0 : i32
    return %arg0, %c0_i32 : i32, i32
  }
  func.func @transform_1(%arg0: i32) -> (i32, i32) {
    %c0_i32 = arith.constant 0 : i32
    %c0_i32_0 = arith.constant 0 : i32
    return %arg0, %c0_i32 : i32, i32
  }
}

</mosaic_0001>

<llo_original>
// kernel: _lambda_.1
$region0: #{_lambda_.1}
  #allocation0 [shape = 'u32[]', space=smem, size = 0x4, offset = 0x4, fixed_abs, tag = 'smem constant byte address 0x4 - core index']
  #allocation1 [shape = 'u32[144,128]{1,0:T(1,128)}', space=vmem, size = 0x12000, scoped, tag = 'internal scratch']
  %s0 = inlined_call_operand.vmem [shape: f32[8,256], index: 0, kind: input, shape index: {}, may-alias: {0,1}]
  %s1 = inlined_call_operand.vmem [shape: f32[8,256], index: 1, kind: output, shape index: {}, may-alias: {0,1}]
  %s2 = sld [smem:[#allocation0]]
  $region14: #{_lambda_.1} parent=0
    _
  %s4 = ssub.s32 1, %s2
  %s5 = scalar_select 0, %s4, %s2
  // Predicated region
  $region2: #{_lambda_.1} parent=0 // pred_check
    _
  $region3: #{_lambda_.1} parent=0 // pred_check_branch
    %7 = sbr.rel (0) target = $region5
  $region4: #{_lambda_.1} parent=0 // pred_region
    _
  $region5: #{_lambda_.1} parent=0 // pred_fallthru
    _
  %v8 = vld [vmem:[%s0] sm:$0xff]
  %v9 = vld [vmem:[%s0 + $0x8] sm:$0xff]
  %10 = vst [vmem:[%s1] sm:$0xff] %v8
  %11 = vst [vmem:[%s1 + $0x8] sm:$0xff] %v9
  // Predicated region
  $region6: #{_lambda_.1} parent=0 // pred_check
    _
  $region7: #{_lambda_.1} parent=0 // pred_check_branch
    %13 = sbr.rel (0) target = $region9
  $region8: #{_lambda_.1} parent=0 // pred_region
    _
  $region9: #{_lambda_.1} parent=0 // pred_fallthru
    _
  // Predicated region
  $region10: #{_lambda_.1} parent=0 // pred_check
    _
  $region11: #{_lambda_.1} parent=0 // pred_check_branch
    %15 = sbr.rel (0) target = $region13
  $region12: #{_lambda_.1} parent=0 // pred_region
    _
  $region13: #{_lambda_.1} parent=0 // pred_fallthru
    _

</llo_original>
